<compile_context>
chip_gen: v7x
topology: tpu7x:2x2x1
jax: 0.10.0
libtpu: 0.0.40
codegen_flags: <defaults>
</compile_context>

<pallas_src>
import jax
import jax.numpy as jnp
from jax import lax
from jax.experimental import pallas as pl
from jax.experimental.pallas import tpu as pltpu

LN_EPS = 1e-5  # nn.LayerNorm default


def _round_up(n, m):
    return ((n + m - 1) // m) * m


def _sublane_pack(dtype):
    itemsize = jnp.dtype(dtype).itemsize
    if itemsize >= 4:
        return 8
    if itemsize == 2:
        return 16
    return 32


def _vmem_capacity_bytes():
    try:
        return int(pltpu.get_tpu_info().vmem_capacity_bytes)
    except Exception:
        return 64 * 1024 * 1024  # conservative (v7x per-TensorCore VMEM)


def _resident_spec(block_shape, index_map):
    """Constant-index operand: single-buffer it when the API supports it."""
    if hasattr(pl, "Buffered"):
        try:
            return pl.BlockSpec(block_shape, index_map, pipeline_mode=pl.Buffered(1))
        except Exception:
            pass
    return pl.BlockSpec(block_shape, index_map)


def _layernorm_epilogue(z, gamma, beta, out_dtype):
    # Two-pass variance: subtract the mean before squaring (no cancellation).
    mean = jnp.mean(z, axis=-1, keepdims=True)
    zc = z - mean
    var = jnp.mean(zc * zc, axis=-1, keepdims=True)
    zn = zc * lax.rsqrt(var + LN_EPS)
    return (zn * gamma + beta).astype(out_dtype)


# ----------------------------------------------------------------------------
# Kernel bodies
# ----------------------------------------------------------------------------
def ffn_resident_kernel(x_ref, w1_ref, b1_ref, w2_ref, b2_ref, gamma_ref,
                        beta_ref, o_ref):
    x = x_ref[...]                                               # (TM, d_model)
    h = jnp.dot(x, w1_ref[...], preferred_element_type=jnp.float32)
    h = jnp.maximum(h + b1_ref[...].astype(jnp.float32), 0.0)    # (TM, d_ff) f32
    y = jnp.dot(h.astype(w2_ref.dtype), w2_ref[...],
                preferred_element_type=jnp.float32)
    y = y + b2_ref[...].astype(jnp.float32)                      # (TM, d_model) f32
    z = y + x.astype(jnp.float32)
    o_ref[...] = _layernorm_epilogue(
        z, gamma_ref[...].astype(jnp.float32),
        beta_ref[...].astype(jnp.float32), o_ref.dtype)


def ffn_ff_tiled_kernel(x_ref, w1_ref, b1_ref, w2_ref, b2_ref, gamma_ref,
                        beta_ref, o_ref, acc_ref):
    j = pl.program_id(1)

    @pl.when(j == 0)
    def _():
        acc_ref[...] = jnp.zeros_like(acc_ref)

    x = x_ref[...]                                               # (TM, d_model), resident over j
    h = jnp.dot(x, w1_ref[...], preferred_element_type=jnp.float32)
    h = jnp.maximum(h + b1_ref[...].astype(jnp.float32), 0.0)    # (TM, tf) f32
    acc_ref[...] += jnp.dot(h.astype(w2_ref.dtype), w2_ref[...],
                            preferred_element_type=jnp.float32)

    @pl.when(j == pl.num_programs(1) - 1)
    def _():
        y = acc_ref[...] + b2_ref[...].astype(jnp.float32)
        z = y + x_ref[...].astype(jnp.float32)
        o_ref[...] = _layernorm_epilogue(
            z, gamma_ref[...].astype(jnp.float32),
            beta_ref[...].astype(jnp.float32), o_ref.dtype)


# ----------------------------------------------------------------------------
# Wrapper
# ----------------------------------------------------------------------------
def feedforward_net(x, w1, b1, w2, b2, gamma, beta, *, tm=None, tf=None,
                    force_path=None):
    """x: (B, S, d_model) -> (B, S, d_model). Weights stored as (in, out)."""
    B, S, d_model = x.shape
    d_ff = w1.shape[1]
    M = B * S
    x2d = x.reshape(M, d_model)

    x_isz = jnp.dtype(x.dtype).itemsize
    w_isz = jnp.dtype(w1.dtype).itemsize
    pack = _sublane_pack(x.dtype)

    vmem_cap = _vmem_capacity_bytes()
    # ~96 MiB on 128 MiB parts (v5e/v6e), ~48 MiB on 64 MiB parts (v7x).
    vmem_limit = max(32 << 20, min((vmem_cap * 3) // 4, 112 << 20))
    budget = int(vmem_limit * 0.85)  # headroom for compiler scratch

    # ---- row-tile size -------------------------------------------------------
    if tm is None:
        # Cap tm so the (tm, d_ff) f32 intermediate (+ its weight-dtype cast)
        # stays within a few MiB of VMEM / vregs.
        per_row_itm = d_ff * (4 + w_isz)
        tm = min(1024 if vmem_cap > (96 << 20) else 512,
                 max(pack, (8 << 20) // max(per_row_itm, 1)))
    tm = max(pack, (tm // pack) * pack)          # dtype-aware sublane pack
    tm = min(tm, _round_up(M, pack))
    # Guarantee >= 2 grid steps (v7x megacore) and prefer an even count.
    while tm > pack:
        steps = _round_up(M, tm) // tm
        if steps >= 2 and (steps % 2 == 0 or steps >= 8):
            break
        tm = max(pack, _round_up(tm // 2, pack))
    m_pad = _round_up(M, tm)
    if m_pad != M:
        x2d = jnp.pad(x2d, ((0, m_pad - M), (0, 0)))
    m_steps = m_pad // tm

    # ---- resident-vs-tiled dispatch ------------------------------------------
    weight_bytes = (2 * d_model * d_ff + d_ff + 3 * d_model) * w_isz
    single_buf = hasattr(pl, "Buffered")
    resident_weight_vmem = weight_bytes * (1 if single_buf else 2)
    stream_vmem = 2 * 2 * tm * d_model * x_isz                  # x + out, 2-buffered
    interm_vmem = tm * d_ff * (4 + w_isz) + 4 * tm * d_model * 4
    use_resident = (resident_weight_vmem + stream_vmem + interm_vmem) <= budget
    if force_path == "resident":
        use_resident = True
    elif force_path == "tiled":
        use_resident = False

    cost = pl.CostEstimate(
        flops=4 * m_pad * d_model * d_ff,            # two matmuls, 2*M*K*N each
        transcendentals=m_pad,                       # one rsqrt per row
        bytes_accessed=(2 * m_pad * d_model * x_isz
                        + weight_bytes * (1 if use_resident else m_steps)),
    )

    if use_resident:
        out2d = pl.pallas_call(
            ffn_resident_kernel,
            out_shape=jax.ShapeDtypeStruct((m_pad, d_model), x.dtype),
            grid=(m_steps,),
            in_specs=[
                pl.BlockSpec((tm, d_model), lambda i: (i, 0)),      # x (streamed)
                _resident_spec((d_model, d_ff), lambda i: (0, 0)),  # w1 (resident, 1-buf)
                _resident_spec((1, d_ff), lambda i: (0, 0)),        # b1
                _resident_spec((d_ff, d_model), lambda i: (0, 0)),  # w2
                _resident_spec((1, d_model), lambda i: (0, 0)),     # b2
                _resident_spec((1, d_model), lambda i: (0, 0)),     # gamma
                _resident_spec((1, d_model), lambda i: (0, 0)),     # beta
            ],
            out_specs=pl.BlockSpec((tm, d_model), lambda i: (i, 0)),
            compiler_params=pltpu.CompilerParams(
                dimension_semantics=("parallel",),
                vmem_limit_bytes=vmem_limit,
            ),
            cost_estimate=cost,
        )(x2d, w1, b1, w2, b2, gamma, beta)
    else:
        # d_ff-tiled accumulator path: bounds VMEM regardless of d_ff.
        if tf is None:
            tf = d_ff
            for cand in (2048, 1024, 512, 256, 128):
                if d_ff % cand != 0:
                    continue
                chunk_vmem = (2 * (2 * d_model * cand + cand) * w_isz   # 2-buf w1/b1/w2 chunks
                              + tm * cand * (4 + w_isz))                # h f32 + cast
                tf = cand
                if chunk_vmem + stream_vmem + tm * d_model * 4 \
                        + 2 * 3 * d_model * w_isz <= budget:
                    break
        ff_steps = d_ff // tf

        out2d = pl.pallas_call(
            ffn_ff_tiled_kernel,
            out_shape=jax.ShapeDtypeStruct((m_pad, d_model), x.dtype),
            grid=(m_steps, ff_steps),
            in_specs=[
                pl.BlockSpec((tm, d_model), lambda i, j: (i, 0)),   # x (resident over j)
                pl.BlockSpec((d_model, tf), lambda i, j: (0, j)),   # w1 chunk
                pl.BlockSpec((1, tf), lambda i, j: (0, j)),         # b1 chunk
                pl.BlockSpec((tf, d_model), lambda i, j: (j, 0)),   # w2 chunk
                _resident_spec((1, d_model), lambda i, j: (0, 0)),  # b2
                _resident_spec((1, d_model), lambda i, j: (0, 0)),  # gamma
                _resident_spec((1, d_model), lambda i, j: (0, 0)),  # beta
            ],
            out_specs=pl.BlockSpec((tm, d_model), lambda i, j: (i, 0)),
            scratch_shapes=[pltpu.VMEM((tm, d_model), jnp.float32)],
            compiler_params=pltpu.CompilerParams(
                dimension_semantics=("parallel", "arbitrary"),
                vmem_limit_bytes=vmem_limit,
            ),
            cost_estimate=cost,
        )(x2d, w1, b1, w2, b2, gamma, beta)

    return out2d[:M].reshape(B, S, d_model)


def init_params(key, d_model, d_ff, dtype=jnp.float32):
    """Deterministic init mimicking nn.Linear / nn.LayerNorm defaults."""
    k1, k2, k3, k4 = jax.random.split(key, 4)
    lim1 = 1.0 / jnp.sqrt(d_model)
    lim2 = 1.0 / jnp.sqrt(d_ff)
    # Stored as (in, out) so the kernel computes x @ W (equiv. to torch x @ W.T).
    w1 = jax.random.uniform(k1, (d_model, d_ff), dtype, -lim1, lim1)
    b1 = jax.random.uniform(k2, (1, d_ff), dtype, -lim1, lim1)
    w2 = jax.random.uniform(k3, (d_ff, d_model), dtype, -lim2, lim2)
    b2 = jax.random.uniform(k4, (1, d_model), dtype, -lim2, lim2)
    gamma = jnp.ones((1, d_model), dtype)
    beta = jnp.zeros((1, d_model), dtype)
    return w1, b1, w2, b2, gamma, beta


if __name__ == "__main__":
    # Small demo shapes; d_model / d_ff are multiples of 128 so stores are
    # unmasked full-lane vst.  (Production shapes should use >=256-wide
    # contraction dims to fill the v6e/v7x 256x256 MXU.)
    B, S, d_model, d_ff = 2, 8, 128, 256
    key = jax.random.PRNGKey(0)
    kx, kp = jax.random.split(key)
    x = jax.random.normal(kx, (B, S, d_model), jnp.float32)
    w1, b1, w2, b2, gamma, beta = init_params(kp, d_model, d_ff)

    # Pure-JAX reference.
    h = jnp.maximum(x @ w1 + b1[0], 0.0)
    y = h @ w2 + b2[0]
    z = y + x
    mu = jnp.mean(z, axis=-1, keepdims=True)
    var = jnp.mean((z - mu) ** 2, axis=-1, keepdims=True)
    ref = (z - mu) / jnp.sqrt(var + LN_EPS) * gamma[0] + beta[0]

    # Default dispatch (resident weights at these sizes).
    out = feedforward_net(x, w1, b1, w2, b2, gamma, beta)
    jax.block_until_ready(out)
    assert jnp.allclose(out, ref, atol=2e-3, rtol=2e-3), "resident path mismatch"

    # Also exercise the d_ff-tiled accumulator fallback (used for large FFNs).
    out_t = feedforward_net(x, w1, b1, w2, b2, gamma, beta,
                            force_path="tiled", tf=128)
    jax.block_until_ready(out_t)
    assert jnp.allclose(out_t, ref, atol=2e-3, rtol=2e-3), "tiled path mismatch"

    print("KERNEL_OK")
</pallas_src>

<mosaic_0001>
module attributes {stable_mosaic.version = 11 : i64} {
  func.func @ffn_resident_kernel(%arg0: i32, %arg1: memref<8x128xf32, #tpu.memory_space<vmem>>, %arg2: memref<128x256xf32, #tpu.memory_space<vmem>>, %arg3: memref<1x256xf32, #tpu.memory_space<vmem>>, %arg4: memref<256x128xf32, #tpu.memory_space<vmem>>, %arg5: memref<1x128xf32, #tpu.memory_space<vmem>>, %arg6: memref<1x128xf32, #tpu.memory_space<vmem>>, %arg7: memref<1x128xf32, #tpu.memory_space<vmem>>, %arg8: memref<8x128xf32, #tpu.memory_space<vmem>>) attributes {dimension_semantics = [#tpu.dimension_semantics<parallel>], iteration_bounds = array<i64: 2>, scalar_prefetch = 0 : i64, scratch_operands = 0 : i64, tpu.core_type = #tpu.core_type<tc>, window_params = [{transform_indices = @transform_0, window_bounds = array<i64: 8, 128>}, {pipeline_mode = #tpu.pipeline_mode<synchronous>, transform_indices = @transform_1, window_bounds = array<i64: 128, 256>}, {pipeline_mode = #tpu.pipeline_mode<synchronous>, transform_indices = @transform_2, window_bounds = array<i64: 1, 256>}, {pipeline_mode = #tpu.pipeline_mode<synchronous>, transform_indices = @transform_3, window_bounds = array<i64: 256, 128>}, {pipeline_mode = #tpu.pipeline_mode<synchronous>, transform_indices = @transform_4, window_bounds = array<i64: 1, 128>}, {pipeline_mode = #tpu.pipeline_mode<synchronous>, transform_indices = @transform_5, window_bounds = array<i64: 1, 128>}, {pipeline_mode = #tpu.pipeline_mode<synchronous>, transform_indices = @transform_6, window_bounds = array<i64: 1, 128>}, {transform_indices = @transform_7, window_bounds = array<i64: 8, 128>}]} {
    %c0 = arith.constant 0 : index
    %c0_0 = arith.constant 0 : index
    %0 = vector.load %arg1[%c0, %c0_0] : memref<8x128xf32, #tpu.memory_space<vmem>>, vector<8x128xf32>
    %c0_1 = arith.constant 0 : index
    %c0_2 = arith.constant 0 : index
    %1 = vector.load %arg2[%c0_1, %c0_2] : memref<128x256xf32, #tpu.memory_space<vmem>>, vector<128x256xf32>
    %cst = arith.constant dense<0.000000e+00> : vector<8x256xf32>
    %2 = tpu.matmul %0, %1, %cst {dimension_numbers = #tpu.dot_dimension_numbers<[1], [0], [0], [1], [0, 0, 1, 1], [], []>} : vector<8x128xf32>, vector<128x256xf32>, vector<8x256xf32> -> vector<8x256xf32>
    %c0_3 = arith.constant 0 : index
    %c0_4 = arith.constant 0 : index
    %3 = vector.load %arg3[%c0_3, %c0_4] : memref<1x256xf32, #tpu.memory_space<vmem>>, vector<1x256xf32>
    %4 = vector.broadcast %3 : vector<1x256xf32> to vector<8x256xf32>
    %5 = arith.addf %2, %4 : vector<8x256xf32>
    %cst_5 = arith.constant 0.000000e+00 : f32
    %6 = vector.broadcast %cst_5 : f32 to vector<8x256xf32>
    %7 = arith.maximumf %5, %6 : vector<8x256xf32>
    %c0_6 = arith.constant 0 : index
    %c0_7 = arith.constant 0 : index
    %8 = vector.load %arg4[%c0_6, %c0_7] : memref<256x128xf32, #tpu.memory_space<vmem>>, vector<256x128xf32>
    %cst_8 = arith.constant dense<0.000000e+00> : vector<8x128xf32>
    %9 = tpu.matmul %7, %8, %cst_8 {dimension_numbers = #tpu.dot_dimension_numbers<[1], [0], [0], [1], [0, 0, 1, 1], [], []>} : vector<8x256xf32>, vector<256x128xf32>, vector<8x128xf32> -> vector<8x128xf32>
    %c0_9 = arith.constant 0 : index
    %c0_10 = arith.constant 0 : index
    %10 = vector.load %arg5[%c0_9, %c0_10] : memref<1x128xf32, #tpu.memory_space<vmem>>, vector<1x128xf32>
    %11 = vector.broadcast %10 : vector<1x128xf32> to vector<8x128xf32>
    %12 = arith.addf %9, %11 : vector<8x128xf32>
    %13 = arith.addf %12, %0 : vector<8x128xf32>
    %c0_11 = arith.constant 0 : index
    %c0_12 = arith.constant 0 : index
    %14 = vector.load %arg6[%c0_11, %c0_12] : memref<1x128xf32, #tpu.memory_space<vmem>>, vector<1x128xf32>
    %c0_13 = arith.constant 0 : index
    %c0_14 = arith.constant 0 : index
    %15 = vector.load %arg7[%c0_13, %c0_14] : memref<1x128xf32, #tpu.memory_space<vmem>>, vector<1x128xf32>
    %cst_15 = arith.constant dense<0.000000e+00> : vector<8xf32>
    %16 = vector.multi_reduction <add>, %13, %cst_15 [1] : vector<8x128xf32> to vector<8xf32>
    %17 = vector.shape_cast %16 : vector<8xf32> to vector<8x1xf32>
    %cst_16 = arith.constant 1.280000e+02 : f32
    %18 = vector.broadcast %cst_16 : f32 to vector<8x1xf32>
    %19 = arith.divf %17, %18 : vector<8x1xf32>
    %20 = vector.broadcast %19 : vector<8x1xf32> to vector<8x128xf32>
    %21 = arith.subf %13, %20 : vector<8x128xf32>
    %22 = arith.mulf %21, %21 : vector<8x128xf32>
    %cst_17 = arith.constant dense<0.000000e+00> : vector<8xf32>
    %23 = vector.multi_reduction <add>, %22, %cst_17 [1] : vector<8x128xf32> to vector<8xf32>
    %24 = vector.shape_cast %23 : vector<8xf32> to vector<8x1xf32>
    %cst_18 = arith.constant 1.280000e+02 : f32
    %25 = vector.broadcast %cst_18 : f32 to vector<8x1xf32>
    %26 = arith.divf %24, %25 : vector<8x1xf32>
    %cst_19 = arith.constant 9.99999974E-6 : f32
    %27 = vector.broadcast %cst_19 : f32 to vector<8x1xf32>
    %28 = arith.addf %26, %27 : vector<8x1xf32>
    %29 = math.rsqrt %28 : vector<8x1xf32>
    %30 = vector.broadcast %29 : vector<8x1xf32> to vector<8x128xf32>
    %31 = arith.mulf %21, %30 : vector<8x128xf32>
    %32 = vector.broadcast %14 : vector<1x128xf32> to vector<8x128xf32>
    %33 = arith.mulf %31, %32 : vector<8x128xf32>
    %34 = vector.broadcast %15 : vector<1x128xf32> to vector<8x128xf32>
    %35 = arith.addf %33, %34 : vector<8x128xf32>
    %c0_20 = arith.constant 0 : index
    %c0_21 = arith.constant 0 : index
    %36 = vector.load %arg8[%c0_20, %c0_21] : memref<8x128xf32, #tpu.memory_space<vmem>>, vector<8x128xf32>
    tpu.vector_store %arg8[%c0_20, %c0_21], %35 {strides = array<i32>} : memref<8x128xf32, #tpu.memory_space<vmem>>, vector<8x128xf32>,
    return
  }
  func.func @transform_0(%arg0: i32) -> (i32, i32) {
    %c0_i32 = arith.constant 0 : i32
    %c0_i32_0 = arith.constant 0 : i32
    return %arg0, %c0_i32 : i32, i32
  }
  func.func @transform_1(%arg0: i32) -> (i32, i32) {
    %c0_i32 = arith.constant 0 : i32
    %c0_i32_0 = arith.constant 0 : i32
    %c0_i32_1 = arith.constant 0 : i32
    return %c0_i32, %c0_i32_0 : i32, i32
  }
  func.func @transform_2(%arg0: i32) -> (i32, i32) {
    %c0_i32 = arith.constant 0 : i32
    %c0_i32_0 = arith.constant 0 : i32
    %c0_i32_1 = arith.constant 0 : i32
    return %c0_i32, %c0_i32_0 : i32, i32
  }
  func.func @transform_3(%arg0: i32) -> (i32, i32) {
    %c0_i32 = arith.constant 0 : i32
    %c0_i32_0 = arith.constant 0 : i32
    %c0_i32_1 = arith.constant 0 : i32
    return %c0_i32, %c0_i32_0 : i32, i32
  }
  func.func @transform_4(%arg0: i32) -> (i32, i32) {
    %c0_i32 = arith.constant 0 : i32
    %c0_i32_0 = arith.constant 0 : i32
    %c0_i32_1 = arith.constant 0 : i32
    return %c0_i32, %c0_i32_0 : i32, i32
  }
  func.func @transform_5(%arg0: i32) -> (i32, i32) {
    %c0_i32 = arith.constant 0 : i32
    %c0_i32_0 = arith.constant 0 : i32
    %c0_i32_1 = arith.constant 0 : i32
    return %c0_i32, %c0_i32_0 : i32, i32
  }
  func.func @transform_6(%arg0: i32) -> (i32, i32) {
    %c0_i32 = arith.constant 0 : i32
    %c0_i32_0 = arith.constant 0 : i32
    %c0_i32_1 = arith.constant 0 : i32
    return %c0_i32, %c0_i32_0 : i32, i32
  }
  func.func @transform_7(%arg0: i32) -> (i32, i32) {
    %c0_i32 = arith.constant 0 : i32
    %c0_i32_0 = arith.constant 0 : i32
    return %arg0, %c0_i32 : i32, i32
  }
}

</mosaic_0001>

<llo_original>
// kernel: tpu_custom_call.1
$region0: #{tpu_custom_call.1}
  #allocation0 [shape = 'u32[]', space=smem, size = 0x4, offset = 0x4, fixed_abs, tag = 'smem constant byte address 0x4 - core index']
  #allocation1 [shape = 'u32[144,128]{1,0:T(1,128)}', space=vmem, size = 0x12000, scoped, tag = 'internal scratch']
  %s0 = inlined_call_operand.hbm [shape: f32[16,128], index: 0, kind: input, shape index: {}]
  %s1 = inlined_call_operand.hbm [shape: f32[128,256], index: 1, kind: input, shape index: {}]
  %s2 = inlined_call_operand.vmem [shape: f32[1,256], index: 2, kind: input, shape index: {}]
  %s3 = inlined_call_operand.hbm [shape: f32[256,128], index: 3, kind: input, shape index: {}]
  %s4 = inlined_call_operand.vmem [shape: f32[1,128], index: 4, kind: input, shape index: {}]
  %s5 = inlined_call_operand.vmem [shape: f32[1,128], index: 5, kind: input, shape index: {}]
  %s6 = inlined_call_operand.vmem [shape: f32[1,128], index: 6, kind: input, shape index: {}]
  %s7 = inlined_call_operand.hbm [shape: f32[16,128], index: 7, kind: output, shape index: {}]
  %s8 = sld [smem:[#allocation0]]
  $region73: #{tpu_custom_call.1} parent=0
    _
  %s10 = ssub.s32 1, %s8
  %s11 = scalar_select 0, %s10, %s8
  $region1: #{tpu_custom_call.1} parent=0
    #allocation2 [shape = 'u8[8192]{0}', space=vmem, size = 0x2000, scoped, tag = 'input window, operand 0']
    #allocation3 [shape = 's32[2]{0}', space=sflag, size = 0x8, scoped, tag = 'scoped memory for tpu_custom_call.1']
    #allocation4 [shape = 's32[2]{0}', space=sflag, size = 0x8, scoped, tag = 'scoped memory for tpu_custom_call.1']
    #allocation5 [shape = 'u8[131072]{0}', space=vmem, size = 0x20000, scoped, tag = 'input window, operand 1, single buffered']
    #allocation6 [shape = 's32[1]{0}', space=sflag, size = 0x4, scoped, tag = 'scoped memory for tpu_custom_call.1']
    #allocation7 [shape = 'u8[131072]{0}', space=vmem, size = 0x20000, scoped, tag = 'input window, operand 3, single buffered']
    #allocation8 [shape = 'u8[8192]{0}', space=vmem, size = 0x2000, scoped, tag = 'output window, operand 0']
    %12 = vsyncpa [#allocation3], 0
    %s13 = scalar_lea.sflag [#allocation3], 1
    %14 = vsyncpa %s13, 0
    %15 = vsyncpa [#allocation6], 0
    %16 = vsyncpa [#allocation4], 0
    %s17 = scalar_lea.sflag [#allocation4], 1
    %18 = vsyncpa %s17, 0
    loop: start=0, step=1, limit=4
    $region2: #{tpu_custom_call.1} parent=1 // loop_pre_header
      _
    $region3: #{tpu_custom_call.1} parent=1 // loop_header
      %s20 = sphi 0, %s24
      %p21 = scmp.ge.s32.totalorder %s20, 4
      %s30 = sphi 0, %s32
      %s33 = sphi 0, %s30
      %s34 = sphi 0, %s33
      %s50 = sphi 0, %s34
      %s54 = sphi 0, %s54
      %s56 = sphi 0, %s54
      %s57 = sphi 0, %s56
      %s71 = sphi 0, %s57
      %s75 = sphi 0, %s75
      %s77 = sphi 0, %s75
      %s78 = sphi 0, %s77
      %s92 = sphi 0, %s78
      %s96 = sphi 0, %s96
      %s98 = sphi 0, %s96
      %s99 = sphi 0, %s98
      %s113 = sphi 0, %s99
      %s117 = sphi 0, %s117
      %s119 = sphi 0, %s117
      %s120 = sphi 0, %s119
      %s134 = sphi 0, %s120
      %s138 = sphi 0, %s138
      %s140 = sphi 0, %s138
      %s141 = sphi 0, %s140
      %s155 = sphi 0, %s141
      %s159 = sphi 0, %s159
      %s161 = sphi 0, %s159
      %s162 = sphi 0, %s161
      %s176 = sphi 0, %s162
      %s182 = sphi 0, %s184
      %s185 = sphi 0, %s182
      %s186 = sphi 0, %s185
      %s202 = sphi 0, %s186
    $region4: #{tpu_custom_call.1} parent=1 // loop_header_branch
      %23 = sbr.rel (%p21) target = $region8
    $region5: #{tpu_custom_call.1} parent=1 // loop_body
      %s25 = ssub.s32 %s20, 1
      %s26 = ssub.s32 %s20, 2
      %s27 = sadd.s32 %s20, 1
      %s28 = ssub.s32 %s20, %s27
      %p29 = scmp.eq.s32.totalorder %s28, 0
      %s31 = sadd.s32 %s30, 1
      %s32 = scalar_select %p29, %s30, %s31
      %p35 = pneg %p29
      %p36 = scmp.eq.s32.totalorder %s20, 1
      %p37 = por %p35, %p36
      %p38 = scmp.ne.s32.totalorder %s30, %s33
      %p39 = scmp.eq.s32.totalorder %s20, 0
      %p40 = por %p38, %p39
      %p41 = scmp.ne.s32.totalorder %s30, %s33
      %p42 = scmp.eq.s32.totalorder %s25, 1
      %p43 = por %p41, %p42
      %p44 = scmp.ne.s32.totalorder %s33, %s34
      %p45 = scmp.eq.s32.totalorder %s25, 0
      %p46 = por %p44, %p45
      %p47 = scmp.ne.s32.totalorder %s33, %s34
      %p48 = scmp.eq.s32.totalorder %s26, 1
      %p49 = por %p47, %p48
      %p51 = scmp.ne.s32.totalorder %s34, %s50
      %p52 = scmp.eq.s32.totalorder %s26, 0
      %p53 = por %p51, %p52
      %s55 = sadd.s32 %s54, 1
      %p58 = scmp.eq.s32.totalorder %s20, 1
      %p59 = scmp.ne.s32.totalorder %s54, %s56
      %p60 = scmp.eq.s32.totalorder %s20, 0
      %p61 = por %p59, %p60
      %p62 = scmp.ne.s32.totalorder %s54, %s56
      %p63 = scmp.eq.s32.totalorder %s25, 1
      %p64 = por %p62, %p63
      %p65 = scmp.ne.s32.totalorder %s56, %s57
      %p66 = scmp.eq.s32.totalorder %s25, 0
      %p67 = por %p65, %p66
      %p68 = scmp.ne.s32.totalorder %s56, %s57
      %p69 = scmp.eq.s32.totalorder %s26, 1
      %p70 = por %p68, %p69
      %p72 = scmp.ne.s32.totalorder %s57, %s71
      %p73 = scmp.eq.s32.totalorder %s26, 0
      %p74 = por %p72, %p73
      %s76 = sadd.s32 %s75, 1
      %p79 = scmp.eq.s32.totalorder %s20, 1
      %p80 = scmp.ne.s32.totalorder %s75, %s77
      %p81 = scmp.eq.s32.totalorder %s20, 0
      %p82 = por %p80, %p81
      %p83 = scmp.ne.s32.totalorder %s75, %s77
      %p84 = scmp.eq.s32.totalorder %s25, 1
      %p85 = por %p83, %p84
      %p86 = scmp.ne.s32.totalorder %s77, %s78
      %p87 = scmp.eq.s32.totalorder %s25, 0
      %p88 = por %p86, %p87
      %p89 = scmp.ne.s32.totalorder %s77, %s78
      %p90 = scmp.eq.s32.totalorder %s26, 1
      %p91 = por %p89, %p90
      %p93 = scmp.ne.s32.totalorder %s78, %s92
      %p94 = scmp.eq.s32.totalorder %s26, 0
      %p95 = por %p93, %p94
      %s97 = sadd.s32 %s96, 1
      %p100 = scmp.eq.s32.totalorder %s20, 1
      %p101 = scmp.ne.s32.totalorder %s96, %s98
      %p102 = scmp.eq.s32.totalorder %s20, 0
      %p103 = por %p101, %p102
      %p104 = scmp.ne.s32.totalorder %s96, %s98
      %p105 = scmp.eq.s32.totalorder %s25, 1
      %p106 = por %p104, %p105
      %p107 = scmp.ne.s32.totalorder %s98, %s99
      %p108 = scmp.eq.s32.totalorder %s25, 0
      %p109 = por %p107, %p108
      %p110 = scmp.ne.s32.totalorder %s98, %s99
      %p111 = scmp.eq.s32.totalorder %s26, 1
      %p112 = por %p110, %p111
      %p114 = scmp.ne.s32.totalorder %s99, %s113
      %p115 = scmp.eq.s32.totalorder %s26, 0
      %p116 = por %p114, %p115
      %s118 = sadd.s32 %s117, 1
      %p121 = scmp.eq.s32.totalorder %s20, 1
      %p122 = scmp.ne.s32.totalorder %s117, %s119
      %p123 = scmp.eq.s32.totalorder %s20, 0
      %p124 = por %p122, %p123
      %p125 = scmp.ne.s32.totalorder %s117, %s119
      %p126 = scmp.eq.s32.totalorder %s25, 1
      %p127 = por %p125, %p126
      %p128 = scmp.ne.s32.totalorder %s119, %s120
      %p129 = scmp.eq.s32.totalorder %s25, 0
      %p130 = por %p128, %p129
      %p131 = scmp.ne.s32.totalorder %s119, %s120
      %p132 = scmp.eq.s32.totalorder %s26, 1
      %p133 = por %p131, %p132
      %p135 = scmp.ne.s32.totalorder %s120, %s134
      %p136 = scmp.eq.s32.totalorder %s26, 0
      %p137 = por %p135, %p136
      %s139 = sadd.s32 %s138, 1
      %p142 = scmp.eq.s32.totalorder %s20, 1
      %p143 = scmp.ne.s32.totalorder %s138, %s140
      %p144 = scmp.eq.s32.totalorder %s20, 0
      %p145 = por %p143, %p144
      %p146 = scmp.ne.s32.totalorder %s138, %s140
      %p147 = scmp.eq.s32.totalorder %s25, 1
      %p148 = por %p146, %p147
      %p149 = scmp.ne.s32.totalorder %s140, %s141
      %p150 = scmp.eq.s32.totalorder %s25, 0
      %p151 = por %p149, %p150
      %p152 = scmp.ne.s32.totalorder %s140, %s141
      %p153 = scmp.eq.s32.totalorder %s26, 1
      %p154 = por %p152, %p153
      %p156 = scmp.ne.s32.totalorder %s141, %s155
      %p157 = scmp.eq.s32.totalorder %s26, 0
      %p158 = por %p156, %p157
      %s160 = sadd.s32 %s159, 1
      %p163 = scmp.eq.s32.totalorder %s20, 1
      %p164 = scmp.ne.s32.totalorder %s159, %s161
      %p165 = scmp.eq.s32.totalorder %s20, 0
      %p166 = por %p164, %p165
      %p167 = scmp.ne.s32.totalorder %s159, %s161
      %p168 = scmp.eq.s32.totalorder %s25, 1
      %p169 = por %p167, %p168
      %p170 = scmp.ne.s32.totalorder %s161, %s162
      %p171 = scmp.eq.s32.totalorder %s25, 0
      %p172 = por %p170, %p171
      %p173 = scmp.ne.s32.totalorder %s161, %s162
      %p174 = scmp.eq.s32.totalorder %s26, 1
      %p175 = por %p173, %p174
      %p177 = scmp.ne.s32.totalorder %s162, %s176
      %p178 = scmp.eq.s32.totalorder %s26, 0
      %p179 = por %p177, %p178
      %s180 = ssub.s32 %s20, %s27
      %p181 = scmp.eq.s32.totalorder %s180, 0
      %s183 = sadd.s32 %s182, 1
      %s184 = scalar_select %p181, %s182, %s183
      %p187 = pneg %p181
      %p188 = scmp.eq.s32.totalorder %s20, 1
      %p189 = por %p187, %p188
      %p190 = scmp.ne.s32.totalorder %s182, %s185
      %p191 = scmp.eq.s32.totalorder %s20, 0
      %p192 = por %p190, %p191
      %p193 = scmp.ne.s32.totalorder %s182, %s185
      %p194 = scmp.eq.s32.totalorder %s25, 1
      %p195 = por %p193, %p194
      %p196 = scmp.ne.s32.totalorder %s185, %s186
      %p197 = scmp.eq.s32.totalorder %s25, 0
      %p198 = por %p196, %p197
      %p199 = scmp.ne.s32.totalorder %s185, %s186
      %p200 = scmp.eq.s32.totalorder %s26, 1
      %p201 = por %p199, %p200
      %p203 = scmp.ne.s32.totalorder %s186, %s202
      %p204 = scmp.eq.s32.totalorder %s26, 0
      %p205 = por %p203, %p204
      %p206 = scmp.le.s32.totalorder 1, %s20
      %p207 = scmp.lt.s32.totalorder %s20, 3
      %p208 = pnand %p206, %p207
      %p209 = pneg %p208
      // Predicated region
      $region9: #{tpu_custom_call.1} parent=5 // pred_check
        _
      $region10: #{tpu_custom_call.1} parent=5 // pred_check_branch
        %211 = sbr.rel (%p208) target = $region12
      $region11: #{tpu_custom_call.1} parent=5 // pred_region
        %s212 = ssub.s32 %s20, 1
        // Predicated region
        $region13: #{tpu_custom_call.1} parent=11 // pred_check
          %p213 = pneg %p67
        $region14: #{tpu_custom_call.1} parent=11 // pred_check_branch
          %215 = sbr.rel (%p213) target = $region16
        $region15: #{tpu_custom_call.1} parent=11 // pred_region
          %s217 = ssub.s32 4096, 4096
          %218 = vsyncadd [#allocation6], %s217
          %s219 = sshll.u32 [#allocation5], 4
          %s220 = int_to_ptr.vmem [resolvable:$true] %s219
          %225 = dma.hbm_to_vmem [thread:$0]  %s1, 4096, %s220, [#allocation6], 256, 256, 16
        $region16: #{tpu_custom_call.1} parent=11 // pred_fallthru
          _
        // Predicated region
        $region17: #{tpu_custom_call.1} parent=11 // pred_check
          %p226 = pneg %p88
        $region18: #{tpu_custom_call.1} parent=11 // pred_check_branch
          %228 = sbr.rel (%p226) target = $region20
        $region19: #{tpu_custom_call.1} parent=11 // pred_region
          _
        $region20: #{tpu_custom_call.1} parent=11 // pred_fallthru
          _
        // Predicated region
        $region21: #{tpu_custom_call.1} parent=11 // pred_check
          %p229 = pneg %p109
        $region22: #{tpu_custom_call.1} parent=11 // pred_check_branch
          %231 = sbr.rel (%p229) target = $region24
        $region23: #{tpu_custom_call.1} parent=11 // pred_region
          %s233 = ssub.s32 4096, 4096
          %234 = vsyncadd [#allocation6], %s233
          %s235 = sshll.u32 [#allocation7], 4
          %s236 = int_to_ptr.vmem [resolvable:$true] %s235
          %241 = dma.hbm_to_vmem [thread:$0]  %s3, 4096, %s236, [#allocation6], 128, 128, 8
        $region24: #{tpu_custom_call.1} parent=11 // pred_fallthru
          _
        // Predicated region
        $region25: #{tpu_custom_call.1} parent=11 // pred_check
          %p242 = pneg %p130
        $region26: #{tpu_custom_call.1} parent=11 // pred_check_branch
          %244 = sbr.rel (%p242) target = $region28
        $region27: #{tpu_custom_call.1} parent=11 // pred_region
          _
        $region28: #{tpu_custom_call.1} parent=11 // pred_fallthru
          _
        // Predicated region
        $region29: #{tpu_custom_call.1} parent=11 // pred_check
          %p245 = pneg %p151
        $region30: #{tpu_custom_call.1} parent=11 // pred_check_branch
          %247 = sbr.rel (%p245) target = $region32
        $region31: #{tpu_custom_call.1} parent=11 // pred_region
          _
        $region32: #{tpu_custom_call.1} parent=11 // pred_fallthru
          _
        // Predicated region
        $region33: #{tpu_custom_call.1} parent=11 // pred_check
          %p248 = pneg %p172
        $region34: #{tpu_custom_call.1} parent=11 // pred_check_branch
          %250 = sbr.rel (%p248) target = $region36
        $region35: #{tpu_custom_call.1} parent=11 // pred_region
          _
        $region36: #{tpu_custom_call.1} parent=11 // pred_fallthru
          _
      $region12: #{tpu_custom_call.1} parent=5 // pred_fallthru
        _
      %p251 = scmp.lt.s32.totalorder %s20, 2
      // Predicated region
      $region37: #{tpu_custom_call.1} parent=5 // pred_check
        %p252 = pneg %p251
      $region38: #{tpu_custom_call.1} parent=5 // pred_check_branch
        %254 = sbr.rel (%p252) target = $region40
      $region39: #{tpu_custom_call.1} parent=5 // pred_region
        // Predicated region
        $region41: #{tpu_custom_call.1} parent=39 // pred_check
          %p255 = pneg %p40
        $region42: #{tpu_custom_call.1} parent=39 // pred_check_branch
          %257 = sbr.rel (%p255) target = $region44
        $region43: #{tpu_custom_call.1} parent=39 // pred_region
          %s258 = sand.u32 %s30, 1
          %s259 = scalar_lea.sflag [#allocation3], %s258
          %s260 = sand.u32 %s30, 1
          %s261 = smul.addr %s260, 8
          %s262 = scalar_lea.vmem [#allocation2], %s261
          %s264 = ssub.s32 128, 128
          %265 = vsyncadd %s259, %s264
          %s266 = smul.addr %s20, 128
          %s267 = scalar_lea.hbm %s0, %s266
          %s269 = sshll.u32 %s262, 4
          %s270 = int_to_ptr.vmem [resolvable:$true] %s269
          %272 = dma.hbm_to_vmem [thread:$0]  %s267, 128, %s270, %s259
        $region44: #{tpu_custom_call.1} parent=39 // pred_fallthru
          _
      $region40: #{tpu_custom_call.1} parent=5 // pred_fallthru
        _
      %p273 = scmp.le.s32.totalorder 1, %s20
      %p274 = scmp.lt.s32.totalorder %s20, 3
      %p275 = pnand %p273, %p274
      %p276 = pneg %p275
      // Predicated region
      $region45: #{tpu_custom_call.1} parent=5 // pred_check
        _
      $region46: #{tpu_custom_call.1} parent=5 // pred_check_branch
        %278 = sbr.rel (%p275) target = $region48
      $region47: #{tpu_custom_call.1} parent=5 // pred_region
        %s279 = ssub.s32 %s20, 1
        %s280 = sand.u32 %s33, 1
        %s281 = scalar_lea.sflag [#allocation3], %s280
        %s282 = sand.u32 %s33, 1
        %s283 = smul.addr %s282, 8
        %s284 = scalar_lea.vmem [#allocation2], %s283
        // Predicated region
        $region49: #{tpu_custom_call.1} parent=47 // pred_check
          %p285 = pneg %p46
        $region50: #{tpu_custom_call.1} parent=47 // pred_check_branch
          %287 = sbr.rel (%p285) target = $region52
        $region51: #{tpu_custom_call.1} parent=47 // pred_region
          %288 = dma.done %s281, 128
        $region52: #{tpu_custom_call.1} parent=47 // pred_fallthru
          _
        // Predicated region
        $region53: #{tpu_custom_call.1} parent=47 // pred_check
          %p289 = pneg %p67
        $region54: #{tpu_custom_call.1} parent=47 // pred_check_branch
          %291 = sbr.rel (%p289) target = $region56
        $region55: #{tpu_custom_call.1} parent=47 // pred_region
          %292 = dma.done [#allocation6], 4096
        $region56: #{tpu_custom_call.1} parent=47 // pred_fallthru
          _
        // Predicated region
        $region57: #{tpu_custom_call.1} parent=47 // pred_check
          %p293 = pneg %p109
        $region58: #{tpu_custom_call.1} parent=47 // pred_check_branch
          %295 = sbr.rel (%p293) target = $region60
        $region59: #{tpu_custom_call.1} parent=47 // pred_region
          %296 = dma.done [#allocation6], 4096
        $region60: #{tpu_custom_call.1} parent=47 // pred_fallthru
          _
        %s297 = sand.u32 %s33, 1
        %s298 = scalar_lea.sflag [#allocation3], %s297
        %s299 = sand.u32 %s33, 1
        %s300 = smul.addr %s299, 8
        %s301 = scalar_lea.vmem [#allocation2], %s300
        %p302 = pneg %p46
        %p303 = pneg %p43
        %p304 = pneg %p67
        %p305 = pneg %p64
        %p306 = pneg %p88
        %p307 = pneg %p85
        %p308 = pneg %p109
        %p309 = pneg %p106
        %p310 = pneg %p130
        %p311 = pneg %p127
        %p312 = pneg %p151
        %p313 = pneg %p148
        %p314 = pneg %p172
        %p315 = pneg %p169
        %p316 = pneg %p198
        %p317 = pneg %p195
        %s318 = sand.u32 %s185, 1
        %s319 = scalar_lea.sflag [#allocation4], %s318
        %s320 = sand.u32 %s185, 1
        %s321 = smul.addr %s320, 8
        %s322 = scalar_lea.vmem [#allocation8], %s321
        %v323 = vld [vmem:[%s284] sm:$0xff]
        %v324 = vld [vmem:[#allocation5] sm:$0xff]
        %v325 = vld [vmem:[#allocation5 + $0x8] sm:$0xff]
        %v326 = vld [vmem:[#allocation5 + $0x10] sm:$0xff]
        %v327 = vld [vmem:[#allocation5 + $0x18] sm:$0xff]
        %v328 = vld [vmem:[#allocation5 + $0x20] sm:$0xff]
        %v329 = vld [vmem:[#allocation5 + $0x28] sm:$0xff]
        %v330 = vld [vmem:[#allocation5 + $0x30] sm:$0xff]
        %v331 = vld [vmem:[#allocation5 + $0x38] sm:$0xff]
        %v332 = vld [vmem:[#allocation5 + $0x40] sm:$0xff]
        %v333 = vld [vmem:[#allocation5 + $0x48] sm:$0xff]
        %v334 = vld [vmem:[#allocation5 + $0x50] sm:$0xff]
        %v335 = vld [vmem:[#allocation5 + $0x58] sm:$0xff]
        %v336 = vld [vmem:[#allocation5 + $0x60] sm:$0xff]
        %v337 = vld [vmem:[#allocation5 + $0x68] sm:$0xff]
        %v338 = vld [vmem:[#allocation5 + $0x70] sm:$0xff]
        %v339 = vld [vmem:[#allocation5 + $0x78] sm:$0xff]
        %v340 = vld [vmem:[#allocation5 + $0x80] sm:$0xff]
        %v341 = vld [vmem:[#allocation5 + $0x88] sm:$0xff]
        %v342 = vld [vmem:[#allocation5 + $0x90] sm:$0xff]
        %v343 = vld [vmem:[#allocation5 + $0x98] sm:$0xff]
        %v344 = vld [vmem:[#allocation5 + $0xa0] sm:$0xff]
        %v345 = vld [vmem:[#allocation5 + $0xa8] sm:$0xff]
        %v346 = vld [vmem:[#allocation5 + $0xb0] sm:$0xff]
        %v347 = vld [vmem:[#allocation5 + $0xb8] sm:$0xff]
        %v348 = vld [vmem:[#allocation5 + $0xc0] sm:$0xff]
        %v349 = vld [vmem:[#allocation5 + $0xc8] sm:$0xff]
        %v350 = vld [vmem:[#allocation5 + $0xd0] sm:$0xff]
        %v351 = vld [vmem:[#allocation5 + $0xd8] sm:$0xff]
        %v352 = vld [vmem:[#allocation5 + $0xe0] sm:$0xff]
        %v353 = vld [vmem:[#allocation5 + $0xe8] sm:$0xff]
        %v354 = vld [vmem:[#allocation5 + $0xf0] sm:$0xff]
        %v355 = vld [vmem:[#allocation5 + $0xf8] sm:$0xff]
        %v356 = vld [vmem:[%s2] sm:$0x3]
        %v358 = vlaneseq
        %v359 = vshrl.u32 %v358, 7
        %v360 = vsub.s32 0, %v359
        %v361 = vrot.slane %v356, %v360
        %v362 = vlaneseq
        %v363 = vshrl.u32 %v362, 7
        %v364 = vsub.s32 1, %v363
        %v365 = vrot.slane %v356, %v364
        %368 = vmatprep.subr.mxu0 %v325
        %369 = vmatpush1.msra.mxu0 %v324
        %370 = vmatprep.subr.mxu0 %v327
        %371 = vmatpush1.msra.mxu0 %v326
        %372 = vmatprep.subr.mxu0 %v329
        %373 = vmatpush1.msra.mxu0 %v328
        %374 = vmatprep.subr.mxu0 %v331
        %375 = vmatpush1.msra.mxu0 %v330
        %376 = vmatprep.subr.mxu0 %v333
        %377 = vmatpush1.msra.mxu0 %v332
        %378 = vmatprep.subr.mxu0 %v335
        %379 = vmatpush1.msra.mxu0 %v334
        %380 = vmatprep.subr.mxu0 %v337
        %381 = vmatpush1.msra.mxu0 %v336
        %382 = vmatprep.subr.mxu0 %v339
        %383 = vmatpush1.msra.mxu0 %v338
        %384 = vmatprep.subr.mxu0 %v341
        %385 = vmatpush1.msra.mxu0 %v340
        %386 = vmatprep.subr.mxu0 %v343
        %387 = vmatpush1.msra.mxu0 %v342
        %388 = vmatprep.subr.mxu0 %v345
        %389 = vmatpush1.msra.mxu0 %v344
        %390 = vmatprep.subr.mxu0 %v347
        %391 = vmatpush1.msra.mxu0 %v346
        %392 = vmatprep.subr.mxu0 %v349
        %393 = vmatpush1.msra.mxu0 %v348
        %394 = vmatprep.subr.mxu0 %v351
        %395 = vmatpush1.msra.mxu0 %v350
        %396 = vmatprep.subr.mxu0 %v353
        %397 = vmatpush1.msra.mxu0 %v352
        %398 = vmatprep.subr.mxu0 %v355
        %399 = vmatpush1.msra.mxu0 %v354
        %400 = vmatprep.subr.mxu0 0.0
        %401 = vmatpush1.msra.mxu0 0.0
        %402 = vmatprep.subr.mxu0 0.0
        %403 = vmatpush1.msra.mxu0 0.0
        %404 = vmatprep.subr.mxu0 0.0
        %405 = vmatpush1.msra.mxu0 0.0
        %406 = vmatprep.subr.mxu0 0.0
        %407 = vmatpush1.msra.mxu0 0.0
        %408 = vmatprep.subr.mxu0 0.0
        %409 = vmatpush1.msra.mxu0 0.0
        %410 = vmatprep.subr.mxu0 0.0
        %411 = vmatpush1.msra.mxu0 0.0
        %412 = vmatprep.subr.mxu0 0.0
        %413 = vmatpush1.msra.mxu0 0.0
        %414 = vmatprep.subr.mxu0 0.0
        %415 = vmatpush1.msra.mxu0 0.0
        %416 = vmatprep.subr.mxu0 0.0
        %417 = vmatpush1.msra.mxu0 0.0
        %418 = vmatprep.subr.mxu0 0.0
        %419 = vmatpush1.msra.mxu0 0.0
        %420 = vmatprep.subr.mxu0 0.0
        %421 = vmatpush1.msra.mxu0 0.0
        %422 = vmatprep.subr.mxu0 0.0
        %423 = vmatpush1.msra.mxu0 0.0
        %424 = vmatprep.subr.mxu0 0.0
        %425 = vmatpush1.msra.mxu0 0.0
        %426 = vmatprep.subr.mxu0 0.0
        %427 = vmatpush1.msra.mxu0 0.0
        %428 = vmatprep.subr.mxu0 0.0
        %429 = vmatpush1.msra.mxu0 0.0
        %430 = vmatprep.subr.mxu0 0.0
        %431 = vmatpush1.msra.mxu0 0.0
        %432 = vmatprep.mubr.f32.mxu0 0.0
        %433 = vmatmul.mubr.f32.gmra.mrb[0].mxu0 %v323
        %v434 = vpop.f32.mrb[0].mxu0
        %v435 = vadd.f32 %v361, %v434
        %v436 = vpop.f32.mrb[0].mxu0
        %v437 = vadd.f32 %v365, %v436
        %438 = vdwg.mxu0
        %v439 = vmax.f32 %v435, 0.0
        %v440 = vmax.f32 %v437, 0.0
        %v441 = vld [vmem:[#allocation7] sm:$0xff]
        %v442 = vld [vmem:[#allocation7 + $0x8] sm:$0xff]
        %v443 = vld [vmem:[#allocation7 + $0x10] sm:$0xff]
        %v444 = vld [vmem:[#allocation7 + $0x18] sm:$0xff]
        %v445 = vld [vmem:[#allocation7 + $0x20] sm:$0xff]
        %v446 = vld [vmem:[#allocation7 + $0x28] sm:$0xff]
        %v447 = vld [vmem:[#allocation7 + $0x30] sm:$0xff]
        %v448 = vld [vmem:[#allocation7 + $0x38] sm:$0xff]
        %v449 = vld [vmem:[#allocation7 + $0x40] sm:$0xff]
        %v450 = vld [vmem:[#allocation7 + $0x48] sm:$0xff]
        %v451 = vld [vmem:[#allocation7 + $0x50] sm:$0xff]
        %v452 = vld [vmem:[#allocation7 + $0x58] sm:$0xff]
        %v453 = vld [vmem:[#allocation7 + $0x60] sm:$0xff]
        %v454 = vld [vmem:[#allocation7 + $0x68] sm:$0xff]
        %v455 = vld [vmem:[#allocation7 + $0x70] sm:$0xff]
        %v456 = vld [vmem:[#allocation7 + $0x78] sm:$0xff]
        %v457 = vld [vmem:[#allocation7 + $0x80] sm:$0xff]
        %v458 = vld [vmem:[#allocation7 + $0x88] sm:$0xff]
        %v459 = vld [vmem:[#allocation7 + $0x90] sm:$0xff]
        %v460 = vld [vmem:[#allocation7 + $0x98] sm:$0xff]
        %v461 = vld [vmem:[#allocation7 + $0xa0] sm:$0xff]
        %v462 = vld [vmem:[#allocation7 + $0xa8] sm:$0xff]
        %v463 = vld [vmem:[#allocation7 + $0xb0] sm:$0xff]
        %v464 = vld [vmem:[#allocation7 + $0xb8] sm:$0xff]
        %v465 = vld [vmem:[#allocation7 + $0xc0] sm:$0xff]
        %v466 = vld [vmem:[#allocation7 + $0xc8] sm:$0xff]
        %v467 = vld [vmem:[#allocation7 + $0xd0] sm:$0xff]
        %v468 = vld [vmem:[#allocation7 + $0xd8] sm:$0xff]
        %v469 = vld [vmem:[#allocation7 + $0xe0] sm:$0xff]
        %v470 = vld [vmem:[#allocation7 + $0xe8] sm:$0xff]
        %v471 = vld [vmem:[#allocation7 + $0xf0] sm:$0xff]
        %v472 = vld [vmem:[#allocation7 + $0xf8] sm:$0xff]
        %v473 = vld [vmem:[%s4] sm:$0x1]
        %v475 = vlaneseq
        %v476 = vshrl.u32 %v475, 7
        %v477 = vsub.s32 0, %v476
        %v478 = vrot.slane %v473, %v477
        %480 = vmatprep.subr.mxu0 0.0
        %481 = vmatpush1.msra.mxu0 %v441
        %482 = vmatprep.subr.mxu0 0.0
        %483 = vmatpush1.msra.mxu0 %v442
        %484 = vmatprep.subr.mxu0 0.0
        %485 = vmatpush1.msra.mxu0 %v443
        %486 = vmatprep.subr.mxu0 0.0
        %487 = vmatpush1.msra.mxu0 %v444
        %488 = vmatprep.subr.mxu0 0.0
        %489 = vmatpush1.msra.mxu0 %v445
        %490 = vmatprep.subr.mxu0 0.0
        %491 = vmatpush1.msra.mxu0 %v446
        %492 = vmatprep.subr.mxu0 0.0
        %493 = vmatpush1.msra.mxu0 %v447
        %494 = vmatprep.subr.mxu0 0.0
        %495 = vmatpush1.msra.mxu0 %v448
        %496 = vmatprep.subr.mxu0 0.0
        %497 = vmatpush1.msra.mxu0 %v449
        %498 = vmatprep.subr.mxu0 0.0
        %499 = vmatpush1.msra.mxu0 %v450
        %500 = vmatprep.subr.mxu0 0.0
        %501 = vmatpush1.msra.mxu0 %v451
        %502 = vmatprep.subr.mxu0 0.0
        %503 = vmatpush1.msra.mxu0 %v452
        %504 = vmatprep.subr.mxu0 0.0
        %505 = vmatpush1.msra.mxu0 %v453
        %506 = vmatprep.subr.mxu0 0.0
        %507 = vmatpush1.msra.mxu0 %v454
        %508 = vmatprep.subr.mxu0 0.0
        %509 = vmatpush1.msra.mxu0 %v455
        %510 = vmatprep.subr.mxu0 0.0
        %511 = vmatpush1.msra.mxu0 %v456
        %512 = vmatprep.subr.mxu0 0.0
        %513 = vmatpush1.msra.mxu0 %v457
        %514 = vmatprep.subr.mxu0 0.0
        %515 = vmatpush1.msra.mxu0 %v458
        %516 = vmatprep.subr.mxu0 0.0
        %517 = vmatpush1.msra.mxu0 %v459
        %518 = vmatprep.subr.mxu0 0.0
        %519 = vmatpush1.msra.mxu0 %v460
        %520 = vmatprep.subr.mxu0 0.0
        %521 = vmatpush1.msra.mxu0 %v461
        %522 = vmatprep.subr.mxu0 0.0
        %523 = vmatpush1.msra.mxu0 %v462
        %524 = vmatprep.subr.mxu0 0.0
        %525 = vmatpush1.msra.mxu0 %v463
        %526 = vmatprep.subr.mxu0 0.0
        %527 = vmatpush1.msra.mxu0 %v464
        %528 = vmatprep.subr.mxu0 0.0
        %529 = vmatpush1.msra.mxu0 %v465
        %530 = vmatprep.subr.mxu0 0.0
        %531 = vmatpush1.msra.mxu0 %v466
        %532 = vmatprep.subr.mxu0 0.0
        %533 = vmatpush1.msra.mxu0 %v467
        %534 = vmatprep.subr.mxu0 0.0
        %535 = vmatpush1.msra.mxu0 %v468
        %536 = vmatprep.subr.mxu0 0.0
        %537 = vmatpush1.msra.mxu0 %v469
        %538 = vmatprep.subr.mxu0 0.0
        %539 = vmatpush1.msra.mxu0 %v470
        %540 = vmatprep.subr.mxu0 0.0
        %541 = vmatpush1.msra.mxu0 %v471
        %542 = vmatprep.subr.mxu0 0.0
        %543 = vmatpush1.msra.mxu0 %v472
        %544 = vmatprep.mubr.f32.mxu0 %v440
        %545 = vmatmul.mubr.f32.gmra.mrb[0].mxu0 %v439
        %v546 = vpop.f32.mrb[0].mxu0
        %v547 = vadd.f32 %v478, %v546
        %v548 = vpop.f32.mrb[0].mxu0
        %549 = vdwg.mxu0
        %v550 = vadd.f32 %v547, %v323
        %v551 = vld [vmem:[%s5] sm:$0x1]
        %v552 = vld [vmem:[%s6] sm:$0x1]
        %553 = vadd.xlane.f32.xlu0 %v550
        %v554 = vpop.xlane.xlu0 %553
        %v555 = vrcp.pop 128.0
        %v556 = vmul.f32 %v554, %v555
        %v557 = vsub.f32 %v550, %v556
        %v558 = vmul.f32 %v557, %v557
        %559 = vadd.xlane.f32.xlu0 %v558
        %v560 = vpop.xlane.xlu0 %559
        %v561 = vmul.f32 %v560, %v555
        %v562 = vadd.f32 %v561, 1e-05
        %v563 = vrsqrt.pop %v562
        %v564 = vmul.f32 %v557, %v563
        %v566 = vlaneseq
        %v567 = vshrl.u32 %v566, 7
        %v568 = vsub.s32 0, %v567
        %v569 = vrot.slane %v551, %v568
        %v571 = vmul.f32 %v564, %v569
        %v573 = vlaneseq
        %v574 = vshrl.u32 %v573, 7
        %v575 = vsub.s32 0, %v574
        %v576 = vrot.slane %v552, %v575
        %v578 = vadd.f32 %v571, %v576
        %579 = vst [vmem:[%s322] sm:$0xff] %v578
        %s580 = sand.u32 %s185, 1
        %s581 = scalar_lea.sflag [#allocation4], %s580
        %s582 = sand.u32 %s185, 1
        %s583 = smul.addr %s582, 8
        %s584 = scalar_lea.vmem [#allocation8], %s583
        // Predicated region
        $region61: #{tpu_custom_call.1} parent=47 // pred_check
          %p585 = pneg %p195
        $region62: #{tpu_custom_call.1} parent=47 // pred_check_branch
          %587 = sbr.rel (%p585) target = $region64
        $region63: #{tpu_custom_call.1} parent=47 // pred_region
          %s589 = ssub.s32 128, 128
          %590 = vsyncadd %s581, %s589
          %s591 = smul.addr %s25, 128
          %s592 = scalar_lea.hbm %s7, %s591
          %s594 = sshll.u32 %s584, 4
          %s595 = int_to_ptr.vmem [resolvable:$true] %s594
          %597 = dma.vmem_to_hbm [thread:$0]  %s595, 128, %s592, %s581
        $region64: #{tpu_custom_call.1} parent=47 // pred_fallthru
          _
      $region48: #{tpu_custom_call.1} parent=5 // pred_fallthru
        _
      %p598 = scmp.le.s32.totalorder 2, %s20
      // Predicated region
      $region65: #{tpu_custom_call.1} parent=5 // pred_check
        %p599 = pneg %p598
      $region66: #{tpu_custom_call.1} parent=5 // pred_check_branch
        %601 = sbr.rel (%p599) target = $region68
      $region67: #{tpu_custom_call.1} parent=5 // pred_region
        %s602 = ssub.s32 %s20, 2
        // Predicated region
        $region69: #{tpu_custom_call.1} parent=67 // pred_check
          %p603 = pneg %p201
        $region70: #{tpu_custom_call.1} parent=67 // pred_check_branch
          %605 = sbr.rel (%p603) target = $region72
        $region71: #{tpu_custom_call.1} parent=67 // pred_region
          %s606 = sand.u32 %s186, 1
          %s607 = scalar_lea.sflag [#allocation4], %s606
          %s608 = sand.u32 %s186, 1
          %s609 = smul.addr %s608, 8
          %s610 = scalar_lea.vmem [#allocation8], %s609
          %611 = dma.done %s607, 128
        $region72: #{tpu_custom_call.1} parent=67 // pred_fallthru
          _
      $region68: #{tpu_custom_call.1} parent=5 // pred_fallthru
        _
    $region6: #{tpu_custom_call.1} parent=1 // loop_footer
      %s24 = sadd.s32 1, %s20
    $region7: #{tpu_custom_call.1} parent=1 // loop_footer_branch
      %19 = sbr.rel target = $region3
    $region8: #{tpu_custom_call.1} parent=1 // loop_exit
      _
    %612 = vsyncpa [#allocation3], 1
    %s613 = scalar_lea.sflag [#allocation3], 1
    %614 = vsyncpa %s613, 1
    %615 = vsyncpa [#allocation6], 1
    %616 = vsyncpa [#allocation4], 1
    %s617 = scalar_lea.sflag [#allocation4], 1
    %618 = vsyncpa %s617, 1

</llo_original>
